<compile_context>
chip_gen: v5e
topology: v5e:2x2
jax: 0.10.0
libtpu: 0.0.40
codegen_flags: <defaults>
</compile_context>

<pallas_src>
import jax
import jax.numpy as jnp
from jax.experimental import pallas as pl
from jax.experimental.pallas import tpu as pltpu


# ---------------------------------------------------------------------------
# Kernel: one decode step for one batch tile.  Grid = (batch_tiles, steps).
# ---------------------------------------------------------------------------
def decoder_kernel(xg_ref, h0_ref, enc_ref, w_h_ref, w_c_ref, b_hh_n_ref,
                   ws_w_ref, ws_b_ref,
                   out_ref, alpha_ref, h_last_ref, h_state):
    f32 = jnp.float32
    step = pl.program_id(1)

    @pl.when(step == 0)
    def _init():
        h_state[...] = h0_ref[...]

    h = h_state[...]                                   # (TB, N) f32
    h_bf = h.astype(jnp.bfloat16)
    enc = enc_ref[...]                                 # (TB, T, N) bf16

    # Per-token gathered rows (identity embedding -> row gathers, done in the
    # wrapper).  Stacked [q, r, z, n]; biases already folded in.
    q_x = xg_ref[0]                                    # (TB, N) f32
    gi_r = xg_ref[1]
    gi_z = xg_ref[2]
    gi_n = xg_ref[3]

    # Attention query with the 'general' matrix folded offline:
    #   q = (Wc_embed[token] + b_c) @ A  +  h @ (Wc_h @ A)
    q = q_x + jnp.dot(h_bf, w_h_ref[0], preferred_element_type=f32)    # (TB, N)

    # energy[b,t] = enc[b,t,:] . q[b,:]    (batched matvec on the MXU)
    q3 = q.astype(jnp.bfloat16)[:, None, :]                            # (TB, 1, N)
    energy = jnp.einsum('bqn,btn->bqt', q3, enc,
                        preferred_element_type=f32)[:, 0, :]           # (TB, T)

    # Stabilized softmax over T; divide on the EUP.
    m = jnp.max(energy, axis=-1, keepdims=True)
    e = jnp.exp(energy - m)
    alpha = e * pl.reciprocal(jnp.sum(e, axis=-1, keepdims=True), approx=True)

    # Weighted context on the MXU: wctx[b,:] = alpha[b,:] @ enc[b,:,:]
    a3 = alpha.astype(jnp.bfloat16)[:, None, :]                        # (TB, 1, T)
    wctx = jnp.einsum('bqt,btn->bqn', a3, enc,
                      preferred_element_type=f32)[:, 0, :]             # (TB, N)
    wctx_bf = wctx.astype(jnp.bfloat16)

    # GRU step, x = cat(embed, wctx); PyTorch gate order [r, z, n].
    # Per-gate (N, N) weights -> no lane-unaligned slicing of fused outputs.
    r = jax.nn.sigmoid(
        gi_r
        + jnp.dot(wctx_bf, w_c_ref[0], preferred_element_type=f32)
        + jnp.dot(h_bf, w_h_ref[1], preferred_element_type=f32))
    z = jax.nn.sigmoid(
        gi_z
        + jnp.dot(wctx_bf, w_c_ref[1], preferred_element_type=f32)
        + jnp.dot(h_bf, w_h_ref[2], preferred_element_type=f32))
    gh_n = jnp.dot(h_bf, w_h_ref[3], preferred_element_type=f32) + b_hh_n_ref[...]
    n = jnp.tanh(
        gi_n
        + jnp.dot(wctx_bf, w_c_ref[2], preferred_element_type=f32)
        + r * gh_n)
    h_new = (1.0 - z) * n + z * h                                      # (TB, N)

    # output = Ws @ cat(h_new, tanh(wctx)) + bs
    out = (jnp.dot(h_new.astype(jnp.bfloat16), ws_w_ref[0], preferred_element_type=f32)
           + jnp.dot(jnp.tanh(wctx).astype(jnp.bfloat16), ws_w_ref[1],
                     preferred_element_type=f32)
           + ws_b_ref[...])                                            # (TB, O)

    out_ref[0] = out
    alpha_ref[0] = alpha
    h_last_ref[...] = h_new
    h_state[...] = h_new


# ---------------------------------------------------------------------------
# Parameter construction / offline folding.
# ---------------------------------------------------------------------------
def init_params(key, input_vocab_size, hidden_size, output_size):
    """Raw f32 weights, PyTorch-equivalent, pre-transposed to (in, out)."""
    V, N, O = input_vocab_size, hidden_size, output_size
    ks = jax.random.split(key, 8)

    def w(k, shape, scale=0.1):
        return (scale * jax.random.normal(k, shape)).astype(jnp.float32)

    return {
        "wc_w": w(ks[0], (V + N, N)),       # wc: Linear(V+N -> N)
        "wc_b": w(ks[1], (1, N)),
        "attn_w": w(ks[2], (N, N)),         # Attn 'general': Linear(N -> N), no bias
        "w_ih": w(ks[3], (V + N, 3 * N)),   # GRU weight_ih_l0.T (gates r, z, n)
        "b_ih": w(ks[4], (1, 3 * N)),
        "w_hh": w(ks[5], (N, 3 * N)),       # GRU weight_hh_l0.T
        "b_hh": w(ks[6], (1, 3 * N)),
        "ws_w": w(ks[7], (2 * N, O)),       # ws: Linear(2N -> O)
        "ws_b": jnp.zeros((1, O), jnp.float32),
    }


def prepare_kernel_params(p):
    """Fold / stack the raw weights for the kernel (bf16 MXU operands)."""
    N = p["wc_w"].shape[1]
    V = p["wc_w"].shape[0] - N
    bf = jnp.bfloat16

    wc_e, wc_h = p["wc_w"][:V], p["wc_w"][V:]
    w_ih_e, w_ih_c = p["w_ih"][:V], p["w_ih"][V:]
    A = p["attn_w"]

    # attn 'general' folded offline: q = x_table[q][token] + h @ (wc_h @ A).
    q_table = (wc_e + p["wc_b"]) @ A                                    # (V, N)
    w_h_q = wc_h @ A                                                    # (N, N)

    # Per-token GRU input rows with b_ih (and the r/z part of b_hh) folded in.
    b_ih, b_hh = p["b_ih"], p["b_hh"]
    gi_r_table = w_ih_e[:, 0 * N:1 * N] + b_ih[:, 0 * N:1 * N] + b_hh[:, 0 * N:1 * N]
    gi_z_table = w_ih_e[:, 1 * N:2 * N] + b_ih[:, 1 * N:2 * N] + b_hh[:, 1 * N:2 * N]
    gi_n_table = w_ih_e[:, 2 * N:3 * N] + b_ih[:, 2 * N:3 * N]

    return {
        # Gather table, rows indexed by token id; stacked [q, r, z, n].
        "x_table": jnp.stack([q_table, gi_r_table, gi_z_table, gi_n_table], 0),  # (4,V,N) f32
        # h-side per-gate weights, stacked [q, r, z, n].
        "w_h": jnp.stack([w_h_q,
                          p["w_hh"][:, 0 * N:1 * N],
                          p["w_hh"][:, 1 * N:2 * N],
                          p["w_hh"][:, 2 * N:3 * N]], 0).astype(bf),              # (4,N,N)
        # wctx-side per-gate weights, stacked [r, z, n].
        "w_c": jnp.stack([w_ih_c[:, 0 * N:1 * N],
                          w_ih_c[:, 1 * N:2 * N],
                          w_ih_c[:, 2 * N:3 * N]], 0).astype(bf),                 # (3,N,N)
        "b_hh_n": b_hh[:, 2 * N:3 * N],                                           # (1,N) f32
        # ws split into [h-part, tanh(ctx)-part].
        "ws_w": jnp.stack([p["ws_w"][:N], p["ws_w"][N:]], 0).astype(bf),          # (2,N,O)
        "ws_b": p["ws_b"],                                                        # (1,O) f32
    }


# ---------------------------------------------------------------------------
# Wrappers.
# ---------------------------------------------------------------------------
def _batch_tile(batch):
    """Batch tile: a multiple of 8 dividing B (sublane-aligned), else full B."""
    if batch % 8 != 0:
        return batch
    for tb in (128, 64, 32, 16, 8):
        if batch % tb == 0:
            return tb
    return batch


def _vmem_limit_bytes():
    # v5e/v6e: 128 MiB physical VMEM; v7x: 64 MiB -> size the scoped limit
    # from the actual chip, leaving headroom.
    try:
        cap = int(pltpu.get_tpu_info().vmem_capacity_bytes)
    except Exception:
        cap = 64 * 1024 * 1024
    return int(min(cap * 3 // 4, 100 * 1024 * 1024))


_VMEM_LIMIT = _vmem_limit_bytes()


@jax.jit
def rnn_attn_decoder2_decode_steps(kparams, input_ids_seq, h0, encoder_outputs):
    """Fused multi-step decode: one pallas_call runs all steps.

    input_ids_seq   : (S, B) int32 token ids (teacher-forced / known ahead).
    h0              : (B, N) initial GRU hidden state.
    encoder_outputs : (B, T, N) float32.
    Returns (outputs (S,B,O), alphas (S,B,T), h_final (B,N)).
    """
    S, B = input_ids_seq.shape
    _, T, N = encoder_outputs.shape
    O = kparams["ws_b"].shape[1]

    TB = _batch_tile(B)
    nb = B // TB

    # Identity-embedding one-hot matmuls -> per-token row gathers (plain JAX
    # glue); stacked per step as [q, r, z, n] rows: (S*4, B, N).
    xg = kparams["x_table"][:, input_ids_seq, :]            # (4, S, B, N) f32
    xg = jnp.transpose(xg, (1, 0, 2, 3)).reshape(S * 4, B, N)

    enc_bf = encoder_outputs.astype(jnp.bfloat16)

    out_seq, alpha_seq, h_final = pl.pallas_call(
        decoder_kernel,
        out_shape=(
            jax.ShapeDtypeStruct((S, B, O), jnp.float32),
            jax.ShapeDtypeStruct((S, B, T), jnp.float32),
            jax.ShapeDtypeStruct((B, N), jnp.float32),
        ),
        grid_spec=pltpu.PrefetchScalarGridSpec(
            num_scalar_prefetch=0,
            grid=(nb, S),
            in_specs=[
                pl.BlockSpec((4, TB, N), lambda b, s: (s, b, 0)),    # per-step gathers
                pl.BlockSpec((TB, N), lambda b, s: (b, 0)),          # h0 (per batch tile)
                pl.BlockSpec((TB, T, N), lambda b, s: (b, 0, 0)),    # enc, resident over steps
                pl.BlockSpec((4, N, N), lambda b, s: (0, 0, 0)),     # w_h, resident
                pl.BlockSpec((3, N, N), lambda b, s: (0, 0, 0)),     # w_c, resident
                pl.BlockSpec((1, N), lambda b, s: (0, 0)),           # b_hh_n
                pl.BlockSpec((2, N, O), lambda b, s: (0, 0, 0)),     # ws_w, resident
                pl.BlockSpec((1, O), lambda b, s: (0, 0)),           # ws_b
            ],
            out_specs=(
                pl.BlockSpec((1, TB, O), lambda b, s: (s, b, 0)),
                pl.BlockSpec((1, TB, T), lambda b, s: (s, b, 0)),
                pl.BlockSpec((TB, N), lambda b, s: (b, 0)),          # final hidden, resident
            ),
            scratch_shapes=[pltpu.VMEM((TB, N), jnp.float32)],       # carried hidden state
        ),
        compiler_params=pltpu.CompilerParams(
            dimension_semantics=("parallel", "arbitrary"),
            vmem_limit_bytes=_VMEM_LIMIT,
        ),
    )(xg, h0, enc_bf,
      kparams["w_h"], kparams["w_c"], kparams["b_hh_n"],
      kparams["ws_w"], kparams["ws_b"])
    return out_seq, alpha_seq, h_final


@jax.jit
def rnn_attn_decoder2_forward(kparams, input_ids, last_ht, last_hidden, encoder_outputs):
    """Module-faithful single step: returns (output, last_ht, hidden, alpha)."""
    # TODO(synk): true autoregressive decoding (feeding back sampled/argmax
    # tokens) would need the sampler inside the kernel; only teacher-forced /
    # known token sequences are fused via rnn_attn_decoder2_decode_steps.
    h0 = last_hidden[-1]
    out_seq, alpha_seq, h_final = rnn_attn_decoder2_decode_steps(
        kparams, input_ids[None, :], h0, encoder_outputs)
    return out_seq[0], last_ht, h_final[None, :, :], alpha_seq[0]


# ---------------------------------------------------------------------------
# Pure-JAX f32 reference (unfused) for correctness checks.
# ---------------------------------------------------------------------------
def reference_forward(p, input_ids, last_hidden, encoder_outputs):
    N = p["wc_w"].shape[1]
    V = p["wc_w"].shape[0] - N
    h = last_hidden[-1]
    embed = jax.nn.one_hot(input_ids, V, dtype=jnp.float32)
    attn_in = jnp.concatenate([embed, h], axis=1) @ p["wc_w"] + p["wc_b"]
    q = attn_in @ p["attn_w"]
    energy = jnp.einsum('btn,bn->bt', encoder_outputs, q)
    alpha = jax.nn.softmax(energy, axis=1)
    wctx = jnp.einsum('bt,btn->bn', alpha, encoder_outputs)
    x = jnp.concatenate([embed, wctx], axis=1)
    gi = x @ p["w_ih"] + p["b_ih"]
    gh = h @ p["w_hh"] + p["b_hh"]
    r = jax.nn.sigmoid(gi[:, :N] + gh[:, :N])
    z = jax.nn.sigmoid(gi[:, N:2 * N] + gh[:, N:2 * N])
    n = jnp.tanh(gi[:, 2 * N:] + r * gh[:, 2 * N:])
    h_new = (1.0 - z) * n + z * h
    out = jnp.concatenate([h_new, jnp.tanh(wctx)], axis=1) @ p["ws_w"] + p["ws_b"]
    return out, h_new, alpha


if __name__ == "__main__":
    B, T = 2, 8
    V, N, O = 16, 32, 16     # input_vocab_size, hidden_size, output_size
    S = 4                    # steps for the fused multi-step decode demo

    key = jax.random.PRNGKey(0)
    kp, k1, k2, k3, k4, k5 = jax.random.split(key, 6)

    raw = init_params(kp, V, N, O)
    kparams = prepare_kernel_params(raw)

    input_ids = jax.random.randint(k1, (B,), 0, V)
    last_ht = jax.random.normal(k2, (B, N), dtype=jnp.float32)
    last_hidden = jax.random.normal(k3, (1, B, N), dtype=jnp.float32)
    encoder_outputs = jax.random.normal(k4, (B, T, N), dtype=jnp.float32)

    # --- module-faithful single step --------------------------------------
    output, ht, hidden, alpha = rnn_attn_decoder2_forward(
        kparams, input_ids, last_ht, last_hidden, encoder_outputs)
    jax.block_until_ready((output, ht, hidden, alpha))

    assert output.shape == (B, O)
    assert hidden.shape == (1, B, N)
    assert alpha.shape == (B, T)

    out_r, h_r, alpha_r = reference_forward(raw, input_ids, last_hidden, encoder_outputs)
    assert bool(jnp.allclose(output, out_r, atol=5e-2, rtol=5e-2))
    assert bool(jnp.allclose(hidden[0], h_r, atol=5e-2, rtol=5e-2))
    assert bool(jnp.allclose(alpha, alpha_r, atol=5e-2, rtol=5e-2))
    assert bool(jnp.allclose(jnp.sum(alpha, axis=1), 1.0, atol=5e-3))

    # --- fused multi-step decode (one pallas_call for all S steps) --------
    ids_seq = jax.random.randint(k5, (S, B), 0, V)
    outs, alphas, h_last = rnn_attn_decoder2_decode_steps(
        kparams, ids_seq, last_hidden[-1], encoder_outputs)
    jax.block_until_ready((outs, alphas, h_last))
    assert outs.shape == (S, B, O) and alphas.shape == (S, B, T)

    h_step = last_hidden[-1]
    for s in range(S):
        o_r, h_step, a_r = reference_forward(raw, ids_seq[s], h_step[None], encoder_outputs)
        assert bool(jnp.allclose(outs[s], o_r, atol=1e-1, rtol=1e-1))
        assert bool(jnp.allclose(alphas[s], a_r, atol=1e-1, rtol=1e-1))
    assert bool(jnp.allclose(h_last, h_step, atol=1e-1, rtol=1e-1))

    print("KERNEL_OK")
</pallas_src>

<mosaic_0001>
module attributes {stable_mosaic.version = 11 : i64} {
  func.func @decoder_kernel(%arg0: i32, %arg1: i32, %arg2: memref<4x2x32xf32, #tpu.memory_space<vmem>>, %arg3: memref<2x32xf32, #tpu.memory_space<vmem>>, %arg4: memref<2x8x32xbf16, #tpu.memory_space<vmem>>, %arg5: memref<4x32x32xbf16, #tpu.memory_space<vmem>>, %arg6: memref<3x32x32xbf16, #tpu.memory_space<vmem>>, %arg7: memref<1x32xf32, #tpu.memory_space<vmem>>, %arg8: memref<2x32x16xbf16, #tpu.memory_space<vmem>>, %arg9: memref<1x16xf32, #tpu.memory_space<vmem>>, %arg10: memref<1x2x16xf32, #tpu.memory_space<vmem>>, %arg11: memref<1x2x8xf32, #tpu.memory_space<vmem>>, %arg12: memref<2x32xf32, #tpu.memory_space<vmem>>, %arg13: memref<2x32xf32, #tpu.memory_space<vmem>>) attributes {dimension_semantics = [#tpu.dimension_semantics<parallel>, #tpu.dimension_semantics<arbitrary>], iteration_bounds = array<i64: 1, 1>, scalar_prefetch = 0 : i64, scratch_operands = 1 : i64, tpu.core_type = #tpu.core_type<tc>, window_params = [{transform_indices = @transform_0, window_bounds = array<i64: 4, 2, 32>}, {transform_indices = @transform_1, window_bounds = array<i64: 2, 32>}, {transform_indices = @transform_2, window_bounds = array<i64: 2, 8, 32>}, {pipeline_mode = #tpu.pipeline_mode<synchronous>, transform_indices = @transform_3, window_bounds = array<i64: 4, 32, 32>}, {pipeline_mode = #tpu.pipeline_mode<synchronous>, transform_indices = @transform_4, window_bounds = array<i64: 3, 32, 32>}, {pipeline_mode = #tpu.pipeline_mode<synchronous>, transform_indices = @transform_5, window_bounds = array<i64: 1, 32>}, {pipeline_mode = #tpu.pipeline_mode<synchronous>, transform_indices = @transform_6, window_bounds = array<i64: 2, 32, 16>}, {pipeline_mode = #tpu.pipeline_mode<synchronous>, transform_indices = @transform_7, window_bounds = array<i64: 1, 16>}, {transform_indices = @transform_8, window_bounds = array<i64: 1, 2, 16>}, {transform_indices = @transform_9, window_bounds = array<i64: 1, 2, 8>}, {transform_indices = @transform_10, window_bounds = array<i64: 2, 32>}]} {
    %c0_i32 = arith.constant 0 : i32
    %0 = arith.cmpi eq, %arg1, %c0_i32 : i32
    %1 = arith.extui %0 : i1 to i32
    %c0_i32_0 = arith.constant 0 : i32
    %2 = arith.cmpi ne, %1, %c0_i32_0 : i32
    scf.if %2 {
      %c0_70 = arith.constant 0 : index
      %c0_71 = arith.constant 0 : index
      %102 = vector.load %arg3[%c0_70, %c0_71] : memref<2x32xf32, #tpu.memory_space<vmem>>, vector<2x32xf32>
      %c0_72 = arith.constant 0 : index
      %c0_73 = arith.constant 0 : index
      %103 = vector.load %arg13[%c0_72, %c0_73] : memref<2x32xf32, #tpu.memory_space<vmem>>, vector<2x32xf32>
      tpu.vector_store %arg13[%c0_72, %c0_73], %102 {strides = array<i32>} : memref<2x32xf32, #tpu.memory_space<vmem>>, vector<2x32xf32>,
    } else {
    }
    %c0 = arith.constant 0 : index
    %c0_1 = arith.constant 0 : index
    %3 = vector.load %arg13[%c0, %c0_1] : memref<2x32xf32, #tpu.memory_space<vmem>>, vector<2x32xf32>
    %4 = arith.truncf %3 : vector<2x32xf32> to vector<2x32xbf16>
    %c0_2 = arith.constant 0 : index
    %c0_3 = arith.constant 0 : index
    %c0_4 = arith.constant 0 : index
    %5 = vector.load %arg4[%c0_2, %c0_3, %c0_4] : memref<2x8x32xbf16, #tpu.memory_space<vmem>>, vector<2x8x32xbf16>
    %c0_5 = arith.constant 0 : index
    %c0_6 = arith.constant 0 : index
    %c0_7 = arith.constant 0 : index
    %6 = vector.load %arg2[%c0_5, %c0_6, %c0_7] : memref<4x2x32xf32, #tpu.memory_space<vmem>>, vector<1x2x32xf32>
    %7 = vector.shape_cast %6 : vector<1x2x32xf32> to vector<2x32xf32>
    %c1 = arith.constant 1 : index
    %c0_8 = arith.constant 0 : index
    %c0_9 = arith.constant 0 : index
    %8 = vector.load %arg2[%c1, %c0_8, %c0_9] : memref<4x2x32xf32, #tpu.memory_space<vmem>>, vector<1x2x32xf32>
    %9 = vector.shape_cast %8 : vector<1x2x32xf32> to vector<2x32xf32>
    %c2 = arith.constant 2 : index
    %c0_10 = arith.constant 0 : index
    %c0_11 = arith.constant 0 : index
    %10 = vector.load %arg2[%c2, %c0_10, %c0_11] : memref<4x2x32xf32, #tpu.memory_space<vmem>>, vector<1x2x32xf32>
    %11 = vector.shape_cast %10 : vector<1x2x32xf32> to vector<2x32xf32>
    %c3 = arith.constant 3 : index
    %c0_12 = arith.constant 0 : index
    %c0_13 = arith.constant 0 : index
    %12 = vector.load %arg2[%c3, %c0_12, %c0_13] : memref<4x2x32xf32, #tpu.memory_space<vmem>>, vector<1x2x32xf32>
    %13 = vector.shape_cast %12 : vector<1x2x32xf32> to vector<2x32xf32>
    %c0_14 = arith.constant 0 : index
    %c0_15 = arith.constant 0 : index
    %c0_16 = arith.constant 0 : index
    %14 = vector.load %arg5[%c0_14, %c0_15, %c0_16] : memref<4x32x32xbf16, #tpu.memory_space<vmem>>, vector<1x32x32xbf16>
    %15 = vector.shape_cast %14 : vector<1x32x32xbf16> to vector<32x32xbf16>
    %cst = arith.constant dense<0.000000e+00> : vector<2x32xf32>
    %16 = tpu.matmul %4, %15, %cst {dimension_numbers = #tpu.dot_dimension_numbers<[1], [0], [0], [1], [0, 0, 1, 1], [], []>} : vector<2x32xbf16>, vector<32x32xbf16>, vector<2x32xf32> -> vector<2x32xf32>
    %17 = arith.addf %7, %16 : vector<2x32xf32>
    %18 = arith.truncf %17 : vector<2x32xf32> to vector<2x32xbf16>
    %19 = vector.shape_cast %18 : vector<2x32xbf16> to vector<2x1x32xbf16>
    "tpu.trace_start"() <{level = 10 : i32, message = "bqn,btn->bqt"}> : () -> ()
    %cst_17 = arith.constant dense<0.000000e+00> : vector<2x1x8xf32>
    %20 = tpu.matmul %19, %5, %cst_17 {dimension_numbers = #tpu.dot_dimension_numbers<[2], [2], [1], [1], [0, 0, 0, 1, 1, 1], [0], [0]>} : vector<2x1x32xbf16>, vector<2x8x32xbf16>, vector<2x1x8xf32> -> vector<2x1x8xf32>
    "tpu.trace_stop"() : () -> ()
    %21 = vector.shape_cast %20 : vector<2x1x8xf32> to vector<2x8xf32>
    %cst_18 = arith.constant dense<0xFF800000> : vector<2xf32>
    %22 = vector.multi_reduction <maximumf>, %21, %cst_18 [1] : vector<2x8xf32> to vector<2xf32>
    %23 = vector.shape_cast %22 : vector<2xf32> to vector<2x1xf32>
    %24 = vector.broadcast %23 : vector<2x1xf32> to vector<2x8xf32>
    %25 = arith.subf %21, %24 : vector<2x8xf32>
    %26 = math.exp %25 : vector<2x8xf32>
    %cst_19 = arith.constant dense<0.000000e+00> : vector<2xf32>
    %27 = vector.multi_reduction <add>, %26, %cst_19 [1] : vector<2x8xf32> to vector<2xf32>
    %28 = vector.shape_cast %27 : vector<2xf32> to vector<2x1xf32>
    %29 = tpu.reciprocal %28 {approx = true} : vector<2x1xf32> -> vector<2x1xf32>
    %30 = vector.broadcast %29 : vector<2x1xf32> to vector<2x8xf32>
    %31 = arith.mulf %26, %30 : vector<2x8xf32>
    %32 = arith.truncf %31 : vector<2x8xf32> to vector<2x8xbf16>
    %33 = vector.shape_cast %32 : vector<2x8xbf16> to vector<2x1x8xbf16>
    "tpu.trace_start"() <{level = 10 : i32, message = "bqt,btn->bqn"}> : () -> ()
    %cst_20 = arith.constant dense<0.000000e+00> : vector<2x1x32xf32>
    %34 = tpu.matmul %33, %5, %cst_20 {dimension_numbers = #tpu.dot_dimension_numbers<[2], [1], [1], [2], [0, 0, 0, 1, 1, 2], [0], [0]>} : vector<2x1x8xbf16>, vector<2x8x32xbf16>, vector<2x1x32xf32> -> vector<2x1x32xf32>
    "tpu.trace_stop"() : () -> ()
    %35 = vector.shape_cast %34 : vector<2x1x32xf32> to vector<2x32xf32>
    %36 = arith.truncf %35 : vector<2x32xf32> to vector<2x32xbf16>
    %c0_21 = arith.constant 0 : index
    %c0_22 = arith.constant 0 : index
    %c0_23 = arith.constant 0 : index
    %37 = vector.load %arg6[%c0_21, %c0_22, %c0_23] : memref<3x32x32xbf16, #tpu.memory_space<vmem>>, vector<1x32x32xbf16>
    %38 = vector.shape_cast %37 : vector<1x32x32xbf16> to vector<32x32xbf16>
    %cst_24 = arith.constant dense<0.000000e+00> : vector<2x32xf32>
    %39 = tpu.matmul %36, %38, %cst_24 {dimension_numbers = #tpu.dot_dimension_numbers<[1], [0], [0], [1], [0, 0, 1, 1], [], []>} : vector<2x32xbf16>, vector<32x32xbf16>, vector<2x32xf32> -> vector<2x32xf32>
    %40 = arith.addf %9, %39 : vector<2x32xf32>
    %c1_25 = arith.constant 1 : index
    %c0_26 = arith.constant 0 : index
    %c0_27 = arith.constant 0 : index
    %41 = vector.load %arg5[%c1_25, %c0_26, %c0_27] : memref<4x32x32xbf16, #tpu.memory_space<vmem>>, vector<1x32x32xbf16>
    %42 = vector.shape_cast %41 : vector<1x32x32xbf16> to vector<32x32xbf16>
    %cst_28 = arith.constant dense<0.000000e+00> : vector<2x32xf32>
    %43 = tpu.matmul %4, %42, %cst_28 {dimension_numbers = #tpu.dot_dimension_numbers<[1], [0], [0], [1], [0, 0, 1, 1], [], []>} : vector<2x32xbf16>, vector<32x32xbf16>, vector<2x32xf32> -> vector<2x32xf32>
    %44 = arith.addf %40, %43 : vector<2x32xf32>
    %45 = arith.negf %44 : vector<2x32xf32>
    %46 = math.exp %45 : vector<2x32xf32>
    %cst_29 = arith.constant 1.000000e+00 : f32
    %47 = vector.broadcast %cst_29 : f32 to vector<2x32xf32>
    %48 = arith.addf %47, %46 : vector<2x32xf32>
    %49 = arith.divf %47, %48 : vector<2x32xf32>
    %c1_30 = arith.constant 1 : index
    %c0_31 = arith.constant 0 : index
    %c0_32 = arith.constant 0 : index
    %50 = vector.load %arg6[%c1_30, %c0_31, %c0_32] : memref<3x32x32xbf16, #tpu.memory_space<vmem>>, vector<1x32x32xbf16>
    %51 = vector.shape_cast %50 : vector<1x32x32xbf16> to vector<32x32xbf16>
    %cst_33 = arith.constant dense<0.000000e+00> : vector<2x32xf32>
    %52 = tpu.matmul %36, %51, %cst_33 {dimension_numbers = #tpu.dot_dimension_numbers<[1], [0], [0], [1], [0, 0, 1, 1], [], []>} : vector<2x32xbf16>, vector<32x32xbf16>, vector<2x32xf32> -> vector<2x32xf32>
    %53 = arith.addf %11, %52 : vector<2x32xf32>
    %c2_34 = arith.constant 2 : index
    %c0_35 = arith.constant 0 : index
    %c0_36 = arith.constant 0 : index
    %54 = vector.load %arg5[%c2_34, %c0_35, %c0_36] : memref<4x32x32xbf16, #tpu.memory_space<vmem>>, vector<1x32x32xbf16>
    %55 = vector.shape_cast %54 : vector<1x32x32xbf16> to vector<32x32xbf16>
    %cst_37 = arith.constant dense<0.000000e+00> : vector<2x32xf32>
    %56 = tpu.matmul %4, %55, %cst_37 {dimension_numbers = #tpu.dot_dimension_numbers<[1], [0], [0], [1], [0, 0, 1, 1], [], []>} : vector<2x32xbf16>, vector<32x32xbf16>, vector<2x32xf32> -> vector<2x32xf32>
    %57 = arith.addf %53, %56 : vector<2x32xf32>
    %58 = arith.negf %57 : vector<2x32xf32>
    %59 = math.exp %58 : vector<2x32xf32>
    %cst_38 = arith.constant 1.000000e+00 : f32
    %60 = vector.broadcast %cst_38 : f32 to vector<2x32xf32>
    %61 = arith.addf %60, %59 : vector<2x32xf32>
    %62 = arith.divf %60, %61 : vector<2x32xf32>
    %c3_39 = arith.constant 3 : index
    %c0_40 = arith.constant 0 : index
    %c0_41 = arith.constant 0 : index
    %63 = vector.load %arg5[%c3_39, %c0_40, %c0_41] : memref<4x32x32xbf16, #tpu.memory_space<vmem>>, vector<1x32x32xbf16>
    %64 = vector.shape_cast %63 : vector<1x32x32xbf16> to vector<32x32xbf16>
    %cst_42 = arith.constant dense<0.000000e+00> : vector<2x32xf32>
    %65 = tpu.matmul %4, %64, %cst_42 {dimension_numbers = #tpu.dot_dimension_numbers<[1], [0], [0], [1], [0, 0, 1, 1], [], []>} : vector<2x32xbf16>, vector<32x32xbf16>, vector<2x32xf32> -> vector<2x32xf32>
    %c0_43 = arith.constant 0 : index
    %c0_44 = arith.constant 0 : index
    %66 = vector.load %arg7[%c0_43, %c0_44] : memref<1x32xf32, #tpu.memory_space<vmem>>, vector<1x32xf32>
    %67 = vector.broadcast %66 : vector<1x32xf32> to vector<2x32xf32>
    %68 = arith.addf %65, %67 : vector<2x32xf32>
    %c2_45 = arith.constant 2 : index
    %c0_46 = arith.constant 0 : index
    %c0_47 = arith.constant 0 : index
    %69 = vector.load %arg6[%c2_45, %c0_46, %c0_47] : memref<3x32x32xbf16, #tpu.memory_space<vmem>>, vector<1x32x32xbf16>
    %70 = vector.shape_cast %69 : vector<1x32x32xbf16> to vector<32x32xbf16>
    %cst_48 = arith.constant dense<0.000000e+00> : vector<2x32xf32>
    %71 = tpu.matmul %36, %70, %cst_48 {dimension_numbers = #tpu.dot_dimension_numbers<[1], [0], [0], [1], [0, 0, 1, 1], [], []>} : vector<2x32xbf16>, vector<32x32xbf16>, vector<2x32xf32> -> vector<2x32xf32>
    %72 = arith.addf %13, %71 : vector<2x32xf32>
    %73 = arith.mulf %49, %68 : vector<2x32xf32>
    %74 = arith.addf %72, %73 : vector<2x32xf32>
    %75 = math.tanh %74 : vector<2x32xf32>
    %cst_49 = arith.constant 1.000000e+00 : f32
    %76 = vector.broadcast %cst_49 : f32 to vector<2x32xf32>
    %77 = arith.subf %76, %62 : vector<2x32xf32>
    %78 = arith.mulf %77, %75 : vector<2x32xf32>
    %79 = arith.mulf %62, %3 : vector<2x32xf32>
    %80 = arith.addf %78, %79 : vector<2x32xf32>
    %81 = arith.truncf %80 : vector<2x32xf32> to vector<2x32xbf16>
    %c0_50 = arith.constant 0 : index
    %c0_51 = arith.constant 0 : index
    %c0_52 = arith.constant 0 : index
    %82 = vector.load %arg8[%c0_50, %c0_51, %c0_52] : memref<2x32x16xbf16, #tpu.memory_space<vmem>>, vector<1x32x16xbf16>
    %83 = vector.shape_cast %82 : vector<1x32x16xbf16> to vector<32x16xbf16>
    %cst_53 = arith.constant dense<0.000000e+00> : vector<2x16xf32>
    %84 = tpu.matmul %81, %83, %cst_53 {dimension_numbers = #tpu.dot_dimension_numbers<[1], [0], [0], [1], [0, 0, 1, 1], [], []>} : vector<2x32xbf16>, vector<32x16xbf16>, vector<2x16xf32> -> vector<2x16xf32>
    %85 = math.tanh %35 : vector<2x32xf32>
    %86 = arith.truncf %85 : vector<2x32xf32> to vector<2x32xbf16>
    %c1_54 = arith.constant 1 : index
    %c0_55 = arith.constant 0 : index
    %c0_56 = arith.constant 0 : index
    %87 = vector.load %arg8[%c1_54, %c0_55, %c0_56] : memref<2x32x16xbf16, #tpu.memory_space<vmem>>, vector<1x32x16xbf16>
    %88 = vector.shape_cast %87 : vector<1x32x16xbf16> to vector<32x16xbf16>
    %cst_57 = arith.constant dense<0.000000e+00> : vector<2x16xf32>
    %89 = tpu.matmul %86, %88, %cst_57 {dimension_numbers = #tpu.dot_dimension_numbers<[1], [0], [0], [1], [0, 0, 1, 1], [], []>} : vector<2x32xbf16>, vector<32x16xbf16>, vector<2x16xf32> -> vector<2x16xf32>
    %90 = arith.addf %84, %89 : vector<2x16xf32>
    %c0_58 = arith.constant 0 : index
    %c0_59 = arith.constant 0 : index
    %91 = vector.load %arg9[%c0_58, %c0_59] : memref<1x16xf32, #tpu.memory_space<vmem>>, vector<1x16xf32>
    %92 = vector.broadcast %91 : vector<1x16xf32> to vector<2x16xf32>
    %93 = arith.addf %90, %92 : vector<2x16xf32>
    %c0_60 = arith.constant 0 : index
    %c0_61 = arith.constant 0 : index
    %c0_62 = arith.constant 0 : index
    %94 = vector.load %arg10[%c0_60, %c0_61, %c0_62] : memref<1x2x16xf32, #tpu.memory_space<vmem>>, vector<1x2x16xf32>
    %95 = vector.shape_cast %94 : vector<1x2x16xf32> to vector<2x16xf32>
    %96 = vector.shape_cast %93 : vector<2x16xf32> to vector<1x2x16xf32>
    tpu.vector_store %arg10[%c0_60, %c0_61, %c0_62], %96 {strides = array<i32>} : memref<1x2x16xf32, #tpu.memory_space<vmem>>, vector<1x2x16xf32>,
    %c0_63 = arith.constant 0 : index
    %c0_64 = arith.constant 0 : index
    %c0_65 = arith.constant 0 : index
    %97 = vector.load %arg11[%c0_63, %c0_64, %c0_65] : memref<1x2x8xf32, #tpu.memory_space<vmem>>, vector<1x2x8xf32>
    %98 = vector.shape_cast %97 : vector<1x2x8xf32> to vector<2x8xf32>
    %99 = vector.shape_cast %31 : vector<2x8xf32> to vector<1x2x8xf32>
    tpu.vector_store %arg11[%c0_63, %c0_64, %c0_65], %99 {strides = array<i32>} : memref<1x2x8xf32, #tpu.memory_space<vmem>>, vector<1x2x8xf32>,
    %c0_66 = arith.constant 0 : index
    %c0_67 = arith.constant 0 : index
    %100 = vector.load %arg12[%c0_66, %c0_67] : memref<2x32xf32, #tpu.memory_space<vmem>>, vector<2x32xf32>
    tpu.vector_store %arg12[%c0_66, %c0_67], %80 {strides = array<i32>} : memref<2x32xf32, #tpu.memory_space<vmem>>, vector<2x32xf32>,
    %c0_68 = arith.constant 0 : index
    %c0_69 = arith.constant 0 : index
    %101 = vector.load %arg13[%c0_68, %c0_69] : memref<2x32xf32, #tpu.memory_space<vmem>>, vector<2x32xf32>
    tpu.vector_store %arg13[%c0_68, %c0_69], %80 {strides = array<i32>} : memref<2x32xf32, #tpu.memory_space<vmem>>, vector<2x32xf32>,
    return
  }
  func.func @transform_0(%arg0: i32, %arg1: i32) -> (i32, i32, i32) {
    %c0_i32 = arith.constant 0 : i32
    %c0_i32_0 = arith.constant 0 : i32
    return %arg1, %arg0, %c0_i32 : i32, i32, i32
  }
  func.func @transform_1(%arg0: i32, %arg1: i32) -> (i32, i32) {
    %c0_i32 = arith.constant 0 : i32
    %c0_i32_0 = arith.constant 0 : i32
    return %arg0, %c0_i32 : i32, i32
  }
  func.func @transform_2(%arg0: i32, %arg1: i32) -> (i32, i32, i32) {
    %c0_i32 = arith.constant 0 : i32
    %c0_i32_0 = arith.constant 0 : i32
    %c0_i32_1 = arith.constant 0 : i32
    return %arg0, %c0_i32, %c0_i32_0 : i32, i32, i32
  }
  func.func @transform_3(%arg0: i32, %arg1: i32) -> (i32, i32, i32) {
    %c0_i32 = arith.constant 0 : i32
    %c0_i32_0 = arith.constant 0 : i32
    %c0_i32_1 = arith.constant 0 : i32
    %c0_i32_2 = arith.constant 0 : i32
    return %c0_i32, %c0_i32_0, %c0_i32_1 : i32, i32, i32
  }
  func.func @transform_4(%arg0: i32, %arg1: i32) -> (i32, i32, i32) {
    %c0_i32 = arith.constant 0 : i32
    %c0_i32_0 = arith.constant 0 : i32
    %c0_i32_1 = arith.constant 0 : i32
    %c0_i32_2 = arith.constant 0 : i32
    return %c0_i32, %c0_i32_0, %c0_i32_1 : i32, i32, i32
  }
  func.func @transform_5(%arg0: i32, %arg1: i32) -> (i32, i32) {
    %c0_i32 = arith.constant 0 : i32
    %c0_i32_0 = arith.constant 0 : i32
    %c0_i32_1 = arith.constant 0 : i32
    return %c0_i32, %c0_i32_0 : i32, i32
  }
  func.func @transform_6(%arg0: i32, %arg1: i32) -> (i32, i32, i32) {
    %c0_i32 = arith.constant 0 : i32
    %c0_i32_0 = arith.constant 0 : i32
    %c0_i32_1 = arith.constant 0 : i32
    %c0_i32_2 = arith.constant 0 : i32
    return %c0_i32, %c0_i32_0, %c0_i32_1 : i32, i32, i32
  }
  func.func @transform_7(%arg0: i32, %arg1: i32) -> (i32, i32) {
    %c0_i32 = arith.constant 0 : i32
    %c0_i32_0 = arith.constant 0 : i32
    %c0_i32_1 = arith.constant 0 : i32
    return %c0_i32, %c0_i32_0 : i32, i32
  }
  func.func @transform_8(%arg0: i32, %arg1: i32) -> (i32, i32, i32) {
    %c0_i32 = arith.constant 0 : i32
    %c0_i32_0 = arith.constant 0 : i32
    return %arg1, %arg0, %c0_i32 : i32, i32, i32
  }
  func.func @transform_9(%arg0: i32, %arg1: i32) -> (i32, i32, i32) {
    %c0_i32 = arith.constant 0 : i32
    %c0_i32_0 = arith.constant 0 : i32
    return %arg1, %arg0, %c0_i32 : i32, i32, i32
  }
  func.func @transform_10(%arg0: i32, %arg1: i32) -> (i32, i32) {
    %c0_i32 = arith.constant 0 : i32
    %c0_i32_0 = arith.constant 0 : i32
    return %arg0, %c0_i32 : i32, i32
  }
}

</mosaic_0001>

<llo_original>
// kernel: rnn_attn_decoder2_decode_steps.1
$region0: #{rnn_attn_decoder2_decode_steps.1}
  #allocation0 [shape = 'u32[]', space=smem, size = 0x4, offset = 0x4, fixed_abs, tag = 'smem constant byte address 0x4 - core index']
  #allocation1 [shape = 'u32[72,128]{1,0:T(1,128)}', space=vmem, size = 0x9000, scoped, tag = 'internal scratch']
  #allocation2 [shape = 'f32[2,32]{1,0:T(2,128)}', space=vmem, size = 0x400, scoped, tag = 'scratch operand']
  %s0 = inlined_call_operand.vmem [shape: f32[4,2,32], index: 0, kind: input, shape index: {}]
  %s1 = inlined_call_operand.vmem [shape: f32[2,32], index: 1, kind: input, shape index: {}]
  %s2 = inlined_call_operand.vmem [shape: bf16[2,8,32], index: 2, kind: input, shape index: {}]
  %s3 = inlined_call_operand.vmem [shape: bf16[4,32,32], index: 3, kind: input, shape index: {}]
  %s4 = inlined_call_operand.vmem [shape: bf16[3,32,32], index: 4, kind: input, shape index: {}]
  %s5 = inlined_call_operand.vmem [shape: f32[1,32], index: 5, kind: input, shape index: {}]
  %s6 = inlined_call_operand.vmem [shape: bf16[2,32,16], index: 6, kind: input, shape index: {}]
  %s7 = inlined_call_operand.vmem [shape: f32[1,16], index: 7, kind: input, shape index: {}]
  %s8 = inlined_call_operand.hbm [shape: f32[1,2,16], index: 8, kind: output, shape index: {0}]
  %s9 = inlined_call_operand.hbm [shape: f32[1,2,8], index: 9, kind: output, shape index: {1}]
  %s10 = inlined_call_operand.hbm [shape: f32[2,32], index: 10, kind: output, shape index: {2}]
  %11 = xla_tuple %s8, %s9, %s10
  %s12 = sld [smem:[#allocation0]]
  $region62: #{rnn_attn_decoder2_decode_steps.1} parent=0
    _
  %s14 = ssub.s32 1, %s12
  %s15 = scalar_select 0, %s14, %s12
  $region1: #{rnn_attn_decoder2_decode_steps.1} parent=0
    #allocation3 [shape = 'u8[1024]{0}', space=vmem, size = 0x400, scoped, tag = 'output window, operand 0, single buffered']
    #allocation4 [shape = 's32[1]{0}', space=sflag, size = 0x4, scoped, tag = 'scoped memory for rnn_attn_decoder2_decode_steps.1']
    #allocation5 [shape = 'u8[1024]{0}', space=vmem, size = 0x400, scoped, tag = 'output window, operand 1, single buffered']
    #allocation6 [shape = 's32[1]{0}', space=sflag, size = 0x4, scoped, tag = 'scoped memory for rnn_attn_decoder2_decode_steps.1']
    #allocation7 [shape = 'u8[1024]{0}', space=vmem, size = 0x400, scoped, tag = 'output window, operand 2, single buffered']
    %16 = vsyncpa [#allocation4], 0
    %17 = vsyncpa [#allocation6], 0
    // Predicated region
    $region2: #{rnn_attn_decoder2_decode_steps.1} parent=1 // pred_check
      _
    $region3: #{rnn_attn_decoder2_decode_steps.1} parent=1 // pred_check_branch
      %19 = sbr.rel (0) target = $region5
    $region4: #{rnn_attn_decoder2_decode_steps.1} parent=1 // pred_region
      _
    $region5: #{rnn_attn_decoder2_decode_steps.1} parent=1 // pred_fallthru
      _
    // Predicated region
    $region6: #{rnn_attn_decoder2_decode_steps.1} parent=1 // pred_check
      _
    $region7: #{rnn_attn_decoder2_decode_steps.1} parent=1 // pred_check_branch
      %21 = sbr.rel (0) target = $region9
    $region8: #{rnn_attn_decoder2_decode_steps.1} parent=1 // pred_region
      _
    $region9: #{rnn_attn_decoder2_decode_steps.1} parent=1 // pred_fallthru
      _
    // Predicated region
    $region10: #{rnn_attn_decoder2_decode_steps.1} parent=1 // pred_check
      _
    $region11: #{rnn_attn_decoder2_decode_steps.1} parent=1 // pred_check_branch
      %23 = sbr.rel (0) target = $region13
    $region12: #{rnn_attn_decoder2_decode_steps.1} parent=1 // pred_region
      _
    $region13: #{rnn_attn_decoder2_decode_steps.1} parent=1 // pred_fallthru
      _
    // Predicated region
    $region14: #{rnn_attn_decoder2_decode_steps.1} parent=1 // pred_check
      _
    $region15: #{rnn_attn_decoder2_decode_steps.1} parent=1 // pred_check_branch
      %25 = sbr.rel (0) target = $region17
    $region16: #{rnn_attn_decoder2_decode_steps.1} parent=1 // pred_region
      _
    $region17: #{rnn_attn_decoder2_decode_steps.1} parent=1 // pred_fallthru
      _
    // Predicated region
    $region18: #{rnn_attn_decoder2_decode_steps.1} parent=1 // pred_check
      _
    $region19: #{rnn_attn_decoder2_decode_steps.1} parent=1 // pred_check_branch
      %27 = sbr.rel (0) target = $region21
    $region20: #{rnn_attn_decoder2_decode_steps.1} parent=1 // pred_region
      _
    $region21: #{rnn_attn_decoder2_decode_steps.1} parent=1 // pred_fallthru
      _
    // Predicated region
    $region22: #{rnn_attn_decoder2_decode_steps.1} parent=1 // pred_check
      _
    $region23: #{rnn_attn_decoder2_decode_steps.1} parent=1 // pred_check_branch
      %29 = sbr.rel (0) target = $region25
    $region24: #{rnn_attn_decoder2_decode_steps.1} parent=1 // pred_region
      _
    $region25: #{rnn_attn_decoder2_decode_steps.1} parent=1 // pred_fallthru
      _
    // Predicated region
    $region26: #{rnn_attn_decoder2_decode_steps.1} parent=1 // pred_check
      _
    $region27: #{rnn_attn_decoder2_decode_steps.1} parent=1 // pred_check_branch
      %31 = sbr.rel (0) target = $region29
    $region28: #{rnn_attn_decoder2_decode_steps.1} parent=1 // pred_region
      _
    $region29: #{rnn_attn_decoder2_decode_steps.1} parent=1 // pred_fallthru
      _
    // Predicated region
    $region30: #{rnn_attn_decoder2_decode_steps.1} parent=1 // pred_check
      _
    $region31: #{rnn_attn_decoder2_decode_steps.1} parent=1 // pred_check_branch
      %33 = sbr.rel (0) target = $region33
    $region32: #{rnn_attn_decoder2_decode_steps.1} parent=1 // pred_region
      _
    $region33: #{rnn_attn_decoder2_decode_steps.1} parent=1 // pred_fallthru
      _
    %p35 = scmp.eq.s32.totalorder 0, 0
    // Predicated region
    $region34: #{rnn_attn_decoder2_decode_steps.1} parent=1 // pred_check
      %p36 = pneg %p35
    $region35: #{rnn_attn_decoder2_decode_steps.1} parent=1 // pred_check_branch
      %38 = sbr.rel (%p36) target = $region37
    $region36: #{rnn_attn_decoder2_decode_steps.1} parent=1 // pred_region
      %v39 = vld [vmem:[%s1] sm:$0x3]
      %vm40 = vcmask 254976
      %41 = vst.msk [vmem:[#allocation2] sm:$0x3] %vm40, %v39
    $region37: #{rnn_attn_decoder2_decode_steps.1} parent=1 // pred_fallthru
      _
    %v42 = vld [vmem:[#allocation2] sm:$0x3]
    %v43 = vpack.c.bf16 %v42, %v42
    %v44 = vld [vmem:[%s2] sm:$0xf]
    %v45 = vld [vmem:[%s2 + $0x4] sm:$0xf]
    %v46 = vld [vmem:[%s0] sm:$0x3]
    %s47 = scalar_lea.vmem %s0, 2
    %v48 = vld [vmem:[%s47] sm:$0x3]
    %s49 = scalar_lea.vmem %s0, 4
    %v50 = vld [vmem:[%s49] sm:$0x3]
    %s51 = scalar_lea.vmem %s0, 6
    %v52 = vld [vmem:[%s51] sm:$0x3]
    %v53 = vld [vmem:[%s3] sm:$0xf]
    %v54 = vld [vmem:[%s3 + $0x4] sm:$0xf]
    %v55 = vld [vmem:[%s3 + $0x8] sm:$0xf]
    %v56 = vld [vmem:[%s3 + $0xc] sm:$0xf]
    %v61 = vunpack.c.l.b16 %v53
    %v62 = vunpack.c.l.b16 %v54
    %v63 = vunpack.c.l.b16 %v55
    %v64 = vunpack.c.l.b16 %v56
    %v65 = vpack.c.b16 %v62, %v61
    %v66 = vpack.c.b16 %v64, %v63
    %vm69 = vcmask 261120
    %v71 = vsel %vm69, %v43, 0
    %73 = vmatpush.bf16.msra.mxu0 0
    %74 = vmatpush.bf16.msra.mxu0 0
    %75 = vmatpush.bf16.msra.mxu0 0
    %76 = vmatpush.bf16.msra.mxu0 0
    %77 = vmatpush.bf16.msra.mxu0 0
    %78 = vmatpush.bf16.msra.mxu0 0
    %79 = vmatpush.bf16.msra.mxu0 %v66
    %80 = vmatpush.bf16.msra.mxu0 %v65
    %81 = vmatmul.bf16.gmra.mxu0 %v71
    %v82 = vpop.f32.mrf.mxu0
    %v83 = vadd.f32 0.0, %v82
    %v84 = vpop.f32.mrf.mxu0
    %85 = vdwg.mxu0
    %v86 = vadd.f32 %v46, %v83
    %v87 = vpack.c.bf16 %v86, %v86
    %v89 = vrot.slane %v87, 3
    %vm90 = vcmask 1040384
    %v93 = vsel %vm90, %v87, %v89
    %v95 = vunpack.i.l.s16 %v93
    %v96 = vunpack.i.h.s16 %v93
    %v97 = vpack.i.b16 %v95, %v95
    %v98 = vperm.slane %v97, 0
    %v100 = vsel %vm69, %v98, 0
    %v103 = vsel %vm69, %v44, 0
    %105 = vmatpush.bf16.xpose.msra.mxu0 0
    %106 = vmatpush.bf16.xpose.msra.mxu0 0
    %107 = vmatpush.bf16.xpose.msra.mxu0 0
    %108 = vmatpush.bf16.xpose.msra.mxu0 0
    %109 = vmatpush.bf16.xpose.msra.mxu0 0
    %110 = vmatpush.bf16.xpose.msra.mxu0 0
    %111 = vmatpush.bf16.xpose.msra.mxu0 0
    %112 = vmatpush.bf16.xpose.msra.mxu0 %v103
    %113 = vmatmul.bf16.gmra.mxu0 %v100
    %v114 = vpop.f32.mrf.mxu0
    %v115 = vadd.f32 0.0, %v114
    %v116 = vpop.f32.mrf.mxu0
    %117 = vdwg.mxu0
    %v118 = vpack.i.b16 %v96, %v96
    %v119 = vperm.slane %v118, 0
    %v121 = vsel %vm69, %v119, 0
    %v124 = vsel %vm69, %v45, 0
    %126 = vmatpush.bf16.xpose.msra.mxu0 0
    %127 = vmatpush.bf16.xpose.msra.mxu0 0
    %128 = vmatpush.bf16.xpose.msra.mxu0 0
    %129 = vmatpush.bf16.xpose.msra.mxu0 0
    %130 = vmatpush.bf16.xpose.msra.mxu0 0
    %131 = vmatpush.bf16.xpose.msra.mxu0 0
    %132 = vmatpush.bf16.xpose.msra.mxu0 0
    %133 = vmatpush.bf16.xpose.msra.mxu0 %v124
    %134 = vmatmul.bf16.gmra.mxu0 %v121
    %v135 = vpop.f32.mrf.mxu0
    %v136 = vadd.f32 0.0, %v135
    %v137 = vpop.f32.mrf.mxu0
    %138 = vdwg.mxu0
    %v141 = vrot.slane %v136, 7
    %vm142 = vcmask 1041409
    %v143 = vsel %vm142, %v141, %v115
    %vm145 = vcmask 58368
    %v146 = vsel %vm145, %v143, -inf
    %147 = vmax.xlane.f32.xlu0 %v146
    %v148 = vpop.xlane.xlu0 %147
    %v150 = vrot.slane %v148, 1
    %v153 = vsub.f32 %v115, %v148
    %v154 = vsub.f32 %v136, %v150
    %v155 = vmul.f32 %v153, 1.442695
    %v156 = vpow.pop %v155
    %v157 = vmul.f32 %v154, 1.442695
    %v158 = vpow.pop %v157
    %v161 = vrot.slane %v158, 7
    %v162 = vsel %vm142, %v161, %v156
    %v164 = vsel %vm145, %v162, 0.0
    %165 = vadd.xlane.f32.xlu0 %v164
    %v166 = vpop.xlane.xlu0 %165
    %v167 = vrcp.pop %v166
    %v169 = vrot.slane %v167, 1
    %v172 = vmul.f32 %v156, %v167
    %v173 = vmul.f32 %v158, %v169
    %v174 = vpack.c.bf16 %v172, %v172
    %v175 = vpack.c.bf16 %v173, %v173
    %vm176 = vcmask 64512
    %v178 = vsel %vm176, %v174, 0
    %vm180 = vcmask 1043456
    %v181 = vsel %vm180, %v44, 0
    %183 = vmatpush.bf16.msra.mxu0 0
    %184 = vmatpush.bf16.msra.mxu0 0
    %185 = vmatpush.bf16.msra.mxu0 0
    %186 = vmatpush.bf16.msra.mxu0 0
    %187 = vmatpush.bf16.msra.mxu0 0
    %188 = vmatpush.bf16.msra.mxu0 0
    %189 = vmatpush.bf16.msra.mxu0 0
    %190 = vmatpush.bf16.msra.mxu0 %v181
    %191 = vmatmul.bf16.gmra.mxu0 %v178
    %v192 = vpop.f32.mrf.mxu0
    %v193 = vadd.f32 0.0, %v192
    %v194 = vpop.f32.mrf.mxu0
    %195 = vdwg.mxu0
    %v197 = vsel %vm176, %v175, 0
    %v199 = vsel %vm180, %v45, 0
    %201 = vmatpush.bf16.msra.mxu0 0
    %202 = vmatpush.bf16.msra.mxu0 0
    %203 = vmatpush.bf16.msra.mxu0 0
    %204 = vmatpush.bf16.msra.mxu0 0
    %205 = vmatpush.bf16.msra.mxu0 0
    %206 = vmatpush.bf16.msra.mxu0 0
    %207 = vmatpush.bf16.msra.mxu0 0
    %208 = vmatpush.bf16.msra.mxu0 %v199
    %209 = vmatmul.bf16.gmra.mxu0 %v197
    %v210 = vpop.f32.mrf.mxu0
    %v211 = vadd.f32 0.0, %v210
    %v212 = vpop.f32.mrf.mxu0
    %213 = vdwg.mxu0
    %v214 = vpack.c.bf16 %v193, %v193
    %v215 = vpack.c.bf16 %v211, %v211
    %v216 = vld [vmem:[%s4] sm:$0xf]
    %v217 = vld [vmem:[%s4 + $0x4] sm:$0xf]
    %v218 = vld [vmem:[%s4 + $0x8] sm:$0xf]
    %v219 = vld [vmem:[%s4 + $0xc] sm:$0xf]
    %v222 = vunpack.c.l.b16 %v214
    %v223 = vunpack.c.l.b16 %v215
    %v224 = vrot.slane %v223, 7
    %v225 = vsel %vm142, %v224, %v222
    %v226 = vpack.c.b16 %v225, %v225
    %v231 = vunpack.c.l.b16 %v216
    %v232 = vunpack.c.l.b16 %v217
    %v233 = vunpack.c.l.b16 %v218
    %v234 = vunpack.c.l.b16 %v219
    %v235 = vpack.c.b16 %v232, %v231
    %v236 = vpack.c.b16 %v234, %v233
    %v240 = vsel %vm69, %v226, 0
    %242 = vmatpush.bf16.msra.mxu0 0
    %243 = vmatpush.bf16.msra.mxu0 0
    %244 = vmatpush.bf16.msra.mxu0 0
    %245 = vmatpush.bf16.msra.mxu0 0
    %246 = vmatpush.bf16.msra.mxu0 0
    %247 = vmatpush.bf16.msra.mxu0 0
    %248 = vmatpush.bf16.msra.mxu0 %v236
    %249 = vmatpush.bf16.msra.mxu0 %v235
    %250 = vmatmul.bf16.gmra.mxu0 %v240
    %v251 = vpop.f32.mrf.mxu0
    %v252 = vadd.f32 0.0, %v251
    %v253 = vpop.f32.mrf.mxu0
    %254 = vdwg.mxu0
    %v255 = vadd.f32 %v48, %v252
    %s256 = scalar_lea.vmem %s3, 16
    %v257 = vld [vmem:[%s256] sm:$0xf]
    %v258 = vld [vmem:[%s256 + $0x4] sm:$0xf]
    %v259 = vld [vmem:[%s256 + $0x8] sm:$0xf]
    %v260 = vld [vmem:[%s256 + $0xc] sm:$0xf]
    %v265 = vunpack.c.l.b16 %v257
    %v266 = vunpack.c.l.b16 %v258
    %v267 = vunpack.c.l.b16 %v259
    %v268 = vunpack.c.l.b16 %v260
    %v269 = vpack.c.b16 %v266, %v265
    %v270 = vpack.c.b16 %v268, %v267
    %273 = vmatpush.bf16.msra.mxu0 0
    %274 = vmatpush.bf16.msra.mxu0 0
    %275 = vmatpush.bf16.msra.mxu0 0
    %276 = vmatpush.bf16.msra.mxu0 0
    %277 = vmatpush.bf16.msra.mxu0 0
    %278 = vmatpush.bf16.msra.mxu0 0
    %279 = vmatpush.bf16.msra.mxu0 %v270
    %280 = vmatpush.bf16.msra.mxu0 %v269
    %281 = vmatmul.bf16.gmra.mxu0 %v71
    %v282 = vpop.f32.mrf.mxu0
    %v283 = vadd.f32 0.0, %v282
    %v284 = vpop.f32.mrf.mxu0
    %285 = vdwg.mxu0
    %v286 = vadd.f32 %v255, %v283
    %v287 = vxor.u32 %v286, 2147483648
    %v288 = vmul.f32 %v287, 1.442695
    %v289 = vpow.pop %v288
    %v290 = vadd.f32 %v289, 1.0
    %v291 = vrcp.pop %v290
    %v292 = vmul.f32 %v290, %v291
    %v293 = vsub.f32 1.0, %v292
    %v294 = vmul.f32 %v291, %v293
    %v295 = vadd.f32 %v291, %v294
    %vm296 = vweird.f32 %v290
    %vm297 = vweird.f32 %v291
    %vm298 = vmor %vm296, %vm297
    %v299 = vsel %vm298, %v291, %v295
    %v300 = vand.u32 2147483647, %v290
    %vm301 = vcmp.eq.f32.partialorder %v300, 8.507059e+37
    %v302 = vand.u32 %v290, 2147483648
    %v303 = vor.u32 1.1754944e-38, %v302
    %v304 = vsel %vm301, %v303, %v299
    %v305 = vmul.f32 1.0, %v304
    %s306 = scalar_lea.vmem %s4, 16
    %v307 = vld [vmem:[%s306] sm:$0xf]
    %v308 = vld [vmem:[%s306 + $0x4] sm:$0xf]
    %v309 = vld [vmem:[%s306 + $0x8] sm:$0xf]
    %v310 = vld [vmem:[%s306 + $0xc] sm:$0xf]
    %v315 = vunpack.c.l.b16 %v307
    %v316 = vunpack.c.l.b16 %v308
    %v317 = vunpack.c.l.b16 %v309
    %v318 = vunpack.c.l.b16 %v310
    %v319 = vpack.c.b16 %v316, %v315
    %v320 = vpack.c.b16 %v318, %v317
    %323 = vmatpush.bf16.msra.mxu0 0
    %324 = vmatpush.bf16.msra.mxu0 0
    %325 = vmatpush.bf16.msra.mxu0 0
    %326 = vmatpush.bf16.msra.mxu0 0
    %327 = vmatpush.bf16.msra.mxu0 0
    %328 = vmatpush.bf16.msra.mxu0 0
    %329 = vmatpush.bf16.msra.mxu0 %v320
    %330 = vmatpush.bf16.msra.mxu0 %v319
    %331 = vmatmul.bf16.gmra.mxu0 %v240
    %v332 = vpop.f32.mrf.mxu0
    %v333 = vadd.f32 0.0, %v332
    %v334 = vpop.f32.mrf.mxu0
    %335 = vdwg.mxu0
    %v336 = vadd.f32 %v50, %v333
    %s337 = scalar_lea.vmem %s3, 32
    %v338 = vld [vmem:[%s337] sm:$0xf]
    %v339 = vld [vmem:[%s337 + $0x4] sm:$0xf]
    %v340 = vld [vmem:[%s337 + $0x8] sm:$0xf]
    %v341 = vld [vmem:[%s337 + $0xc] sm:$0xf]
    %v346 = vunpack.c.l.b16 %v338
    %v347 = vunpack.c.l.b16 %v339
    %v348 = vunpack.c.l.b16 %v340
    %v349 = vunpack.c.l.b16 %v341
    %v350 = vpack.c.b16 %v347, %v346
    %v351 = vpack.c.b16 %v349, %v348
    %354 = vmatpush.bf16.msra.mxu0 0
    %355 = vmatpush.bf16.msra.mxu0 0
    %356 = vmatpush.bf16.msra.mxu0 0
    %357 = vmatpush.bf16.msra.mxu0 0
    %358 = vmatpush.bf16.msra.mxu0 0
    %359 = vmatpush.bf16.msra.mxu0 0
    %360 = vmatpush.bf16.msra.mxu0 %v351
    %361 = vmatpush.bf16.msra.mxu0 %v350
    %362 = vmatmul.bf16.gmra.mxu0 %v71
    %v363 = vpop.f32.mrf.mxu0
    %v364 = vadd.f32 0.0, %v363
    %v365 = vpop.f32.mrf.mxu0
    %366 = vdwg.mxu0
    %v367 = vadd.f32 %v336, %v364
    %v368 = vxor.u32 %v367, 2147483648
    %v369 = vmul.f32 %v368, 1.442695
    %v370 = vpow.pop %v369
    %v371 = vadd.f32 %v370, 1.0
    %v372 = vrcp.pop %v371
    %v373 = vmul.f32 %v371, %v372
    %v374 = vsub.f32 1.0, %v373
    %v375 = vmul.f32 %v372, %v374
    %v376 = vadd.f32 %v372, %v375
    %vm377 = vweird.f32 %v371
    %vm378 = vweird.f32 %v372
    %vm379 = vmor %vm377, %vm378
    %v380 = vsel %vm379, %v372, %v376
    %v381 = vand.u32 2147483647, %v371
    %vm382 = vcmp.eq.f32.partialorder %v381, 8.507059e+37
    %v383 = vand.u32 %v371, 2147483648
    %v384 = vor.u32 1.1754944e-38, %v383
    %v385 = vsel %vm382, %v384, %v380
    %v386 = vmul.f32 1.0, %v385
    %s387 = scalar_lea.vmem %s3, 48
    %v388 = vld [vmem:[%s387] sm:$0xf]
    %v389 = vld [vmem:[%s387 + $0x4] sm:$0xf]
    %v390 = vld [vmem:[%s387 + $0x8] sm:$0xf]
    %v391 = vld [vmem:[%s387 + $0xc] sm:$0xf]
    %v392 = vld [vmem:[%s5] sm:$0x1]
    %v394 = vperm.slane %v392, 0
    %v400 = vunpack.c.l.b16 %v388
    %v401 = vunpack.c.l.b16 %v389
    %v402 = vunpack.c.l.b16 %v390
    %v403 = vunpack.c.l.b16 %v391
    %v404 = vpack.c.b16 %v401, %v400
    %v405 = vpack.c.b16 %v403, %v402
    %408 = vmatpush.bf16.msra.mxu0 0
    %409 = vmatpush.bf16.msra.mxu0 0
    %410 = vmatpush.bf16.msra.mxu0 0
    %411 = vmatpush.bf16.msra.mxu0 0
    %412 = vmatpush.bf16.msra.mxu0 0
    %413 = vmatpush.bf16.msra.mxu0 0
    %414 = vmatpush.bf16.msra.mxu0 %v405
    %415 = vmatpush.bf16.msra.mxu0 %v404
    %416 = vmatmul.bf16.gmra.mxu0 %v71
    %v417 = vpop.f32.mrf.mxu0
    %v418 = vadd.f32 %v394, %v417
    %v419 = vpop.f32.mrf.mxu0
    %420 = vdwg.mxu0
    %s421 = scalar_lea.vmem %s4, 32
    %v422 = vld [vmem:[%s421] sm:$0xf]
    %v423 = vld [vmem:[%s421 + $0x4] sm:$0xf]
    %v424 = vld [vmem:[%s421 + $0x8] sm:$0xf]
    %v425 = vld [vmem:[%s421 + $0xc] sm:$0xf]
    %v430 = vunpack.c.l.b16 %v422
    %v431 = vunpack.c.l.b16 %v423
    %v432 = vunpack.c.l.b16 %v424
    %v433 = vunpack.c.l.b16 %v425
    %v434 = vpack.c.b16 %v431, %v430
    %v435 = vpack.c.b16 %v433, %v432
    %438 = vmatpush.bf16.msra.mxu0 0
    %439 = vmatpush.bf16.msra.mxu0 0
    %440 = vmatpush.bf16.msra.mxu0 0
    %441 = vmatpush.bf16.msra.mxu0 0
    %442 = vmatpush.bf16.msra.mxu0 0
    %443 = vmatpush.bf16.msra.mxu0 0
    %444 = vmatpush.bf16.msra.mxu0 %v435
    %445 = vmatpush.bf16.msra.mxu0 %v434
    %446 = vmatmul.bf16.gmra.mxu0 %v240
    %v447 = vpop.f32.mrf.mxu0
    %v448 = vadd.f32 0.0, %v447
    %v449 = vpop.f32.mrf.mxu0
    %450 = vdwg.mxu0
    %v451 = vadd.f32 %v52, %v448
    %v452 = vmul.f32 %v305, %v418
    %v453 = vadd.f32 %v451, %v452
    %v454 = vtanh.pop %v453
    %v455 = vsub.f32 1.0, %v386
    %v456 = vmul.f32 %v455, %v454
    %v457 = vmul.f32 %v386, %v42
    %v458 = vadd.f32 %v456, %v457
    %v459 = vpack.c.bf16 %v458, %v458
    %v460 = vld [vmem:[%s6] sm:$0xf]
    %v461 = vld [vmem:[%s6 + $0x4] sm:$0xf]
    %v462 = vld [vmem:[%s6 + $0x8] sm:$0xf]
    %v463 = vld [vmem:[%s6 + $0xc] sm:$0xf]
    %v464 = vtanh.pop %v193
    %v465 = vtanh.pop %v211
    %v466 = vpack.c.bf16 %v464, %v464
    %v467 = vpack.c.bf16 %v465, %v465
    %s468 = scalar_lea.vmem %s6, 16
    %v469 = vld [vmem:[%s468] sm:$0xf]
    %v470 = vld [vmem:[%s468 + $0x4] sm:$0xf]
    %v471 = vld [vmem:[%s468 + $0x8] sm:$0xf]
    %v472 = vld [vmem:[%s468 + $0xc] sm:$0xf]
    %v475 = vunpack.c.l.b16 %v466
    %v476 = vunpack.c.l.b16 %v467
    %v477 = vrot.slane %v476, 7
    %v478 = vsel %vm142, %v477, %v475
    %v479 = vpack.c.b16 %v478, %v478
    %v484 = vunpack.c.l.b16 %v469
    %v485 = vunpack.c.l.b16 %v470
    %v486 = vunpack.c.l.b16 %v471
    %v487 = vunpack.c.l.b16 %v472
    %v488 = vpack.c.b16 %v485, %v484
    %v489 = vpack.c.b16 %v487, %v486
    %v493 = vsel %vm69, %v479, 0
    %495 = vmatpush.bf16.msra.mxu0 0
    %496 = vmatpush.bf16.msra.mxu0 0
    %497 = vmatpush.bf16.msra.mxu0 0
    %498 = vmatpush.bf16.msra.mxu0 0
    %499 = vmatpush.bf16.msra.mxu0 0
    %500 = vmatpush.bf16.msra.mxu0 0
    %501 = vmatpush.bf16.msra.mxu0 %v489
    %502 = vmatpush.bf16.msra.mxu0 %v488
    %503 = vmatmul.bf16.gmra.mxu0 %v493
    %v504 = vpop.f32.mrf.mxu0
    %v505 = vadd.f32 0.0, %v504
    %v506 = vpop.f32.mrf.mxu0
    %507 = vdwg.mxu0
    %v512 = vunpack.c.l.b16 %v460
    %v513 = vunpack.c.l.b16 %v461
    %v514 = vunpack.c.l.b16 %v462
    %v515 = vunpack.c.l.b16 %v463
    %v516 = vpack.c.b16 %v513, %v512
    %v517 = vpack.c.b16 %v515, %v514
    %v521 = vsel %vm69, %v459, 0
    %523 = vmatpush.bf16.msra.mxu0 0
    %524 = vmatpush.bf16.msra.mxu0 0
    %525 = vmatpush.bf16.msra.mxu0 0
    %526 = vmatpush.bf16.msra.mxu0 0
    %527 = vmatpush.bf16.msra.mxu0 0
    %528 = vmatpush.bf16.msra.mxu0 0
    %529 = vmatpush.bf16.msra.mxu0 %v517
    %530 = vmatpush.bf16.msra.mxu0 %v516
    %531 = vmatmul.bf16.gmra.mxu0 %v521
    %v532 = vpop.f32.mrf.mxu0
    %v533 = vadd.f32 %v505, %v532
    %v534 = vpop.f32.mrf.mxu0
    %535 = vdwg.mxu0
    %v536 = vld [vmem:[%s7] sm:$0x1]
    %v538 = vperm.slane %v536, 0
    %v540 = vadd.f32 %v533, %v538
    %vm541 = vcmask 123904
    %542 = vst.msk [vmem:[#allocation3] sm:$0x3] %vm541, %v540
    %v545 = vrot.slane %v173, 7
    %v546 = vsel %vm142, %v545, %v172
    %548 = vst.msk [vmem:[#allocation5] sm:$0x3] %vm145, %v546
    %vm549 = vcmask 254976
    %550 = vst.msk [vmem:[#allocation7] sm:$0x3] %vm549, %v458
    %551 = vst.msk [vmem:[#allocation2] sm:$0x3] %vm549, %v458
    // Predicated region
    $region38: #{rnn_attn_decoder2_decode_steps.1} parent=1 // pred_check
      _
    $region39: #{rnn_attn_decoder2_decode_steps.1} parent=1 // pred_check_branch
      %553 = sbr.rel (0) target = $region41
    $region40: #{rnn_attn_decoder2_decode_steps.1} parent=1 // pred_region
      %555 = vsyncadd [#allocation4], 0
      %s557 = sshll.u32 [#allocation3], 4
      %s558 = int_to_ptr.vmem [resolvable:$true] %s557
      %s559 = sshll.u32 %s8, 4
      %s560 = int_to_ptr.hbm [resolvable:$true] %s559
      %562 = dma.vmem_to_hbm [thread:$0]  %s558, 32, %s560, [#allocation4]
    $region41: #{rnn_attn_decoder2_decode_steps.1} parent=1 // pred_fallthru
      _
    // Predicated region
    $region42: #{rnn_attn_decoder2_decode_steps.1} parent=1 // pred_check
      _
    $region43: #{rnn_attn_decoder2_decode_steps.1} parent=1 // pred_check_branch
      %564 = sbr.rel (0) target = $region45
    $region44: #{rnn_attn_decoder2_decode_steps.1} parent=1 // pred_region
      %566 = vsyncadd [#allocation6], 0
      %s568 = sshll.u32 [#allocation5], 4
      %s569 = int_to_ptr.vmem [resolvable:$true] %s568
      %s570 = sshll.u32 %s9, 4
      %s571 = int_to_ptr.hbm [resolvable:$true] %s570
      %573 = dma.vmem_to_hbm [thread:$0]  %s569, 32, %s571, [#allocation6]
    $region45: #{rnn_attn_decoder2_decode_steps.1} parent=1 // pred_fallthru
      _
    // Predicated region
    $region46: #{rnn_attn_decoder2_decode_steps.1} parent=1 // pred_check
      _
    $region47: #{rnn_attn_decoder2_decode_steps.1} parent=1 // pred_check_branch
      %575 = sbr.rel (0) target = $region49
    $region48: #{rnn_attn_decoder2_decode_steps.1} parent=1 // pred_region
      %577 = vsyncadd [#allocation6], 0
      %s579 = sshll.u32 [#allocation7], 4
      %s580 = int_to_ptr.vmem [resolvable:$true] %s579
      %s581 = sshll.u32 %s10, 4
      %s582 = int_to_ptr.hbm [resolvable:$true] %s581
      %584 = dma.vmem_to_hbm [thread:$0]  %s580, 32, %s582, [#allocation6]
    $region49: #{rnn_attn_decoder2_decode_steps.1} parent=1 // pred_fallthru
      _
    // Predicated region
    $region50: #{rnn_attn_decoder2_decode_steps.1} parent=1 // pred_check
      _
    $region51: #{rnn_attn_decoder2_decode_steps.1} parent=1 // pred_check_branch
      %586 = sbr.rel (0) target = $region53
    $region52: #{rnn_attn_decoder2_decode_steps.1} parent=1 // pred_region
      %588 = dma.done [#allocation4], 32
    $region53: #{rnn_attn_decoder2_decode_steps.1} parent=1 // pred_fallthru
      _
    // Predicated region
    $region54: #{rnn_attn_decoder2_decode_steps.1} parent=1 // pred_check
      _
    $region55: #{rnn_attn_decoder2_decode_steps.1} parent=1 // pred_check_branch
      %590 = sbr.rel (0) target = $region57
    $region56: #{rnn_attn_decoder2_decode_steps.1} parent=1 // pred_region
      %592 = dma.done [#allocation6], 32
    $region57: #{rnn_attn_decoder2_decode_steps.1} parent=1 // pred_fallthru
      _
    // Predicated region
    $region58: #{rnn_attn_decoder2_decode_steps.1} parent=1 // pred_check
      _
    $region59: #{rnn_attn_decoder2_decode_steps.1} parent=1 // pred_check_branch
      %594 = sbr.rel (0) target = $region61
    $region60: #{rnn_attn_decoder2_decode_steps.1} parent=1 // pred_region
      %596 = dma.done [#allocation6], 32
    $region61: #{rnn_attn_decoder2_decode_steps.1} parent=1 // pred_fallthru
      _
    %597 = vsyncpa [#allocation4], 1
    %598 = vsyncpa [#allocation6], 1

</llo_original>
